<compile_context>
chip_gen: v6e
topology: v6e:2x2x1
jax: 0.10.0
libtpu: 0.0.40
codegen_flags: <defaults>
</compile_context>

<pallas_src>
import functools

import jax
import jax.numpy as jnp
from jax.experimental import pallas as pl
from jax.experimental.pallas import tpu as pltpu

HF = 128  # fused/padded hidden width (holds 2*H) and padded output slab width


def _round_up(x, m):
    return ((x + m - 1) // m) * m


def _make_fused_kernel(dp):
    """dp = feature dim padded to a multiple of 8; all offsets below are 8-aligned."""
    o_w1 = 0
    o_b1 = dp
    o_w2 = dp + 8
    o_b2 = dp + 8 + HF
    o_w3 = dp + 16 + HF
    o_b3 = dp + 16 + 2 * HF

    def kernel(obs_ref, p_ref, out_ref):
        # obs.float() from the torch forward (cast in-kernel; HBM copy stays narrow).
        x = obs_ref[...].astype(jnp.float32)                                  # (TB, dp)

        w1 = p_ref[o_w1:o_w1 + dp, :]                                         # (dp, 128)
        b1 = p_ref[o_b1:o_b1 + 1, :]                                          # (1, 128)
        h1 = jnp.tanh(jnp.dot(x, w1, preferred_element_type=jnp.float32) + b1)

        w2 = p_ref[o_w2:o_w2 + HF, :]                                         # (128, 128)
        b2 = p_ref[o_b2:o_b2 + 1, :]
        h2 = jnp.tanh(jnp.dot(h1, w2, preferred_element_type=jnp.float32) + b2)

        w3 = p_ref[o_w3:o_w3 + HF, :]                                         # (128, 128)
        b3 = p_ref[o_b3:o_b3 + 1, :]
        out_ref[...] = jnp.dot(h2, w3, preferred_element_type=jnp.float32) + b3

    return kernel


def pack_params(params, obs_dim, hidden, num_outputs):
    """Pack the 12 policy/value tensors into a single (R, 128) f32 buffer.

    Row layout (each segment padded to a multiple of 8 rows):
      [W1f (dp) | b1f (8) | W2f (128) | b2f (8) | W3f (128) | b3f (8)]
    Column layout: policy tower uses cols [0,H), value tower cols [H,2H); heads write
    logits to cols [0,num_outputs) and value to col num_outputs. Remaining cols are zero.
    """
    D, H, NO = obs_dim, hidden, num_outputs
    assert 2 * H <= HF and NO + 1 <= HF, "fused layout assumes 2H<=128 and num_outputs+1<=128"
    dp = _round_up(D, 8)
    R = dp + 24 + 2 * HF

    buf = jnp.zeros((R, HF), jnp.float32)
    # Layer 1: [w1 | vw1]
    buf = buf.at[0:D, 0:H].set(params["w1"].astype(jnp.float32))
    buf = buf.at[0:D, H:2 * H].set(params["vw1"].astype(jnp.float32))
    buf = buf.at[dp, 0:H].set(params["b1"].reshape(-1).astype(jnp.float32))
    buf = buf.at[dp, H:2 * H].set(params["vb1"].reshape(-1).astype(jnp.float32))
    # Layer 2: blockdiag(w2, vw2)
    o_w2 = dp + 8
    buf = buf.at[o_w2:o_w2 + H, 0:H].set(params["w2"].astype(jnp.float32))
    buf = buf.at[o_w2 + H:o_w2 + 2 * H, H:2 * H].set(params["vw2"].astype(jnp.float32))
    o_b2 = o_w2 + HF
    buf = buf.at[o_b2, 0:H].set(params["b2"].reshape(-1).astype(jnp.float32))
    buf = buf.at[o_b2, H:2 * H].set(params["vb2"].reshape(-1).astype(jnp.float32))
    # Heads: logits cols [0,NO), value col NO
    o_w3 = o_b2 + 8
    buf = buf.at[o_w3:o_w3 + H, 0:NO].set(params["w3"].astype(jnp.float32))
    buf = buf.at[o_w3 + H:o_w3 + 2 * H, NO:NO + 1].set(params["vw3"].astype(jnp.float32))
    o_b3 = o_w3 + HF
    buf = buf.at[o_b3, 0:NO].set(params["b3"].reshape(-1).astype(jnp.float32))
    buf = buf.at[o_b3, NO].set(params["vb3"].reshape(()).astype(jnp.float32))
    return buf


@functools.partial(jax.jit, static_argnames=("obs_dim", "hidden", "num_outputs"))
def torch_custom_model_forward(obs, params, *, obs_dim, hidden, num_outputs):
    """Returns (fc_out [B, num_outputs], value [B]) — value == reshape(value_function(), [-1])."""
    B, D = obs.shape
    assert D == obs_dim
    dp = _round_up(D, 8)

    # Packing is pure layout work; under jit it is hoisted/constant-folded per param set.
    packed = pack_params(params, obs_dim, hidden, num_outputs)
    R = packed.shape[0]

    # Pad feature dim to the 8-aligned dp used by the packed W1 segment (zeros -> exact).
    if dp != D:
        obs = jnp.pad(obs, ((0, 0), (0, dp - D)))

    # Batch tiling: big tiles for pipelining, but never larger than the (padded) batch.
    tile_b = min(512, _round_up(B, 8))
    Bp = _round_up(B, tile_b)
    if Bp != B:
        obs = jnp.pad(obs, ((0, Bp - B), (0, 0)))
    grid = (pl.cdiv(Bp, tile_b),)

    itemsize = jnp.dtype(obs.dtype).itemsize
    cost = pl.CostEstimate(
        flops=2 * Bp * (dp * HF + HF * HF + HF * HF),
        transcendentals=2 * Bp * HF,
        bytes_accessed=Bp * dp * itemsize + R * HF * 4 + Bp * HF * 4,
    )

    out = pl.pallas_call(
        _make_fused_kernel(dp),
        out_shape=jax.ShapeDtypeStruct((Bp, HF), jnp.float32),
        grid=grid,
        in_specs=[
            pl.BlockSpec((tile_b, dp), lambda i: (i, 0)),   # obs tile, pipelined over batch
            pl.BlockSpec((R, HF), lambda i: (0, 0)),        # packed params, VMEM-resident
        ],
        out_specs=pl.BlockSpec((tile_b, HF), lambda i: (i, 0)),  # single lane-dense slab
        compiler_params=pltpu.CompilerParams(
            dimension_semantics=("parallel",),
            vmem_limit_bytes=32 * 1024 * 1024,
        ),
        cost_estimate=cost,
    )(obs, packed)

    # Un-pad + split the slab in plain JAX (glue, not kernel math).
    logits = out[:B, :num_outputs]
    value = out[:B, num_outputs]          # == torch.reshape(value_function(), [-1])
    return logits, value


def init_params(key, obs_dim, hidden, num_outputs):
    """Deterministic synthetic parameters; biases kept 2-D (1, H)."""
    keys = jax.random.split(key, 6)

    def lin(k, fan_in, fan_out):
        scale = 1.0 / jnp.sqrt(jnp.float32(fan_in))
        return jax.random.normal(k, (fan_in, fan_out), jnp.float32) * scale

    return {
        # policy tower
        "w1": lin(keys[0], obs_dim, hidden), "b1": jnp.zeros((1, hidden), jnp.float32),
        "w2": lin(keys[1], hidden, hidden),  "b2": jnp.zeros((1, hidden), jnp.float32),
        "w3": lin(keys[2], hidden, num_outputs), "b3": jnp.zeros((1, num_outputs), jnp.float32),
        # value tower (separate, vf_share_layers=False)
        "vw1": lin(keys[3], obs_dim, hidden), "vb1": jnp.zeros((1, hidden), jnp.float32),
        "vw2": lin(keys[4], hidden, hidden),  "vb2": jnp.zeros((1, hidden), jnp.float32),
        "vw3": lin(keys[5], hidden, 1),       "vb3": jnp.zeros((1, 1), jnp.float32),
    }


if __name__ == "__main__":
    key = jax.random.PRNGKey(0)
    k_obs, k_par = jax.random.split(key)

    B, D, H, NUM_OUTPUTS = 8, 16, 32, 4
    obs = jax.random.normal(k_obs, (B, D), jnp.float32)
    params = init_params(k_par, D, H, NUM_OUTPUTS)

    fc_out, value = torch_custom_model_forward(
        obs, params, obs_dim=D, hidden=H, num_outputs=NUM_OUTPUTS)
    jax.block_until_ready((fc_out, value))

    # Pure-JAX reference for a sanity check.
    def ref(x, p):
        h1 = jnp.tanh(x @ p["w1"] + p["b1"])
        h2 = jnp.tanh(h1 @ p["w2"] + p["b2"])
        logits = h2 @ p["w3"] + p["b3"]
        v1 = jnp.tanh(x @ p["vw1"] + p["vb1"])
        v2 = jnp.tanh(v1 @ p["vw2"] + p["vb2"])
        val = (v2 @ p["vw3"] + p["vb3"]).reshape(-1)
        return logits, val

    ref_logits, ref_value = ref(obs, params)
    assert fc_out.shape == (B, NUM_OUTPUTS) and value.shape == (B,)
    assert jnp.allclose(fc_out, ref_logits, atol=2e-5), "logits mismatch"
    assert jnp.allclose(value, ref_value, atol=2e-5), "value mismatch"

    print("KERNEL_OK")
</pallas_src>

<mosaic_0001>
module attributes {stable_mosaic.version = 11 : i64} {
  func.func @kernel(%arg0: i32, %arg1: memref<8x16xf32, #tpu.memory_space<vmem>>, %arg2: memref<296x128xf32, #tpu.memory_space<vmem>>, %arg3: memref<8x128xf32, #tpu.memory_space<vmem>>) attributes {dimension_semantics = [#tpu.dimension_semantics<parallel>], iteration_bounds = array<i64: 1>, scalar_prefetch = 0 : i64, scratch_operands = 0 : i64, tpu.core_type = #tpu.core_type<tc>, window_params = [{transform_indices = @transform_0, window_bounds = array<i64: 8, 16>}, {pipeline_mode = #tpu.pipeline_mode<synchronous>, transform_indices = @transform_1, window_bounds = array<i64: 296, 128>}, {transform_indices = @transform_2, window_bounds = array<i64: 8, 128>}]} {
    %c0 = arith.constant 0 : index
    %c0_0 = arith.constant 0 : index
    %0 = vector.load %arg1[%c0, %c0_0] : memref<8x16xf32, #tpu.memory_space<vmem>>, vector<8x16xf32>
    %c0_1 = arith.constant 0 : index
    %c0_2 = arith.constant 0 : index
    %1 = vector.load %arg2[%c0_1, %c0_2] : memref<296x128xf32, #tpu.memory_space<vmem>>, vector<16x128xf32>
    %c16 = arith.constant 16 : index
    %c0_3 = arith.constant 0 : index
    %2 = vector.load %arg2[%c16, %c0_3] : memref<296x128xf32, #tpu.memory_space<vmem>>, vector<1x128xf32>
    %cst = arith.constant dense<0.000000e+00> : vector<8x128xf32>
    %3 = tpu.matmul %0, %1, %cst {dimension_numbers = #tpu.dot_dimension_numbers<[1], [0], [0], [1], [0, 0, 1, 1], [], []>} : vector<8x16xf32>, vector<16x128xf32>, vector<8x128xf32> -> vector<8x128xf32>
    %4 = vector.broadcast %2 : vector<1x128xf32> to vector<8x128xf32>
    %5 = arith.addf %3, %4 : vector<8x128xf32>
    %6 = math.tanh %5 : vector<8x128xf32>
    %c24 = arith.constant 24 : index
    %c0_4 = arith.constant 0 : index
    %7 = vector.load %arg2[%c24, %c0_4] : memref<296x128xf32, #tpu.memory_space<vmem>>, vector<128x128xf32>
    %c152 = arith.constant 152 : index
    %c0_5 = arith.constant 0 : index
    %8 = vector.load %arg2[%c152, %c0_5] : memref<296x128xf32, #tpu.memory_space<vmem>>, vector<1x128xf32>
    %cst_6 = arith.constant dense<0.000000e+00> : vector<8x128xf32>
    %9 = tpu.matmul %6, %7, %cst_6 {dimension_numbers = #tpu.dot_dimension_numbers<[1], [0], [0], [1], [0, 0, 1, 1], [], []>} : vector<8x128xf32>, vector<128x128xf32>, vector<8x128xf32> -> vector<8x128xf32>
    %10 = vector.broadcast %8 : vector<1x128xf32> to vector<8x128xf32>
    %11 = arith.addf %9, %10 : vector<8x128xf32>
    %12 = math.tanh %11 : vector<8x128xf32>
    %c160 = arith.constant 160 : index
    %c0_7 = arith.constant 0 : index
    %13 = vector.load %arg2[%c160, %c0_7] : memref<296x128xf32, #tpu.memory_space<vmem>>, vector<128x128xf32>
    %c288 = arith.constant 288 : index
    %c0_8 = arith.constant 0 : index
    %14 = vector.load %arg2[%c288, %c0_8] : memref<296x128xf32, #tpu.memory_space<vmem>>, vector<1x128xf32>
    %cst_9 = arith.constant dense<0.000000e+00> : vector<8x128xf32>
    %15 = tpu.matmul %12, %13, %cst_9 {dimension_numbers = #tpu.dot_dimension_numbers<[1], [0], [0], [1], [0, 0, 1, 1], [], []>} : vector<8x128xf32>, vector<128x128xf32>, vector<8x128xf32> -> vector<8x128xf32>
    %16 = vector.broadcast %14 : vector<1x128xf32> to vector<8x128xf32>
    %17 = arith.addf %15, %16 : vector<8x128xf32>
    %c0_10 = arith.constant 0 : index
    %c0_11 = arith.constant 0 : index
    %18 = vector.load %arg3[%c0_10, %c0_11] : memref<8x128xf32, #tpu.memory_space<vmem>>, vector<8x128xf32>
    tpu.vector_store %arg3[%c0_10, %c0_11], %17 {strides = array<i32>} : memref<8x128xf32, #tpu.memory_space<vmem>>, vector<8x128xf32>,
    return
  }
  func.func @transform_0(%arg0: i32) -> (i32, i32) {
    %c0_i32 = arith.constant 0 : i32
    %c0_i32_0 = arith.constant 0 : i32
    return %arg0, %c0_i32 : i32, i32
  }
  func.func @transform_1(%arg0: i32) -> (i32, i32) {
    %c0_i32 = arith.constant 0 : i32
    %c0_i32_0 = arith.constant 0 : i32
    %c0_i32_1 = arith.constant 0 : i32
    return %c0_i32, %c0_i32_0 : i32, i32
  }
  func.func @transform_2(%arg0: i32) -> (i32, i32) {
    %c0_i32 = arith.constant 0 : i32
    %c0_i32_0 = arith.constant 0 : i32
    return %arg0, %c0_i32 : i32, i32
  }
}

</mosaic_0001>

<llo_original>
// kernel: torch_custom_model_forward.1
$region0: #{torch_custom_model_forward.1}
  #allocation0 [shape = 'u32[]', space=smem, size = 0x4, offset = 0x4, fixed_abs, tag = 'smem constant byte address 0x4 - core index']
  #allocation1 [shape = 'u32[144,128]{1,0:T(1,128)}', space=vmem, size = 0x12000, scoped, tag = 'internal scratch']
  %s0 = inlined_call_operand.vmem [shape: f32[8,16], index: 0, kind: input, shape index: {}]
  %s1 = inlined_call_operand.vmem [shape: f32[296,128], index: 1, kind: input, shape index: {}]
  %s2 = inlined_call_operand.vmem [shape: f32[8,128], index: 2, kind: output, shape index: {}]
  %s3 = sld [smem:[#allocation0]]
  $region18: #{torch_custom_model_forward.1} parent=0
    _
  %s5 = ssub.s32 1, %s3
  %s6 = scalar_select 0, %s5, %s3
  // Predicated region
  $region2: #{torch_custom_model_forward.1} parent=0 // pred_check
    _
  $region3: #{torch_custom_model_forward.1} parent=0 // pred_check_branch
    %8 = sbr.rel (0) target = $region5
  $region4: #{torch_custom_model_forward.1} parent=0 // pred_region
    _
  $region5: #{torch_custom_model_forward.1} parent=0 // pred_fallthru
    _
  // Predicated region
  $region6: #{torch_custom_model_forward.1} parent=0 // pred_check
    _
  $region7: #{torch_custom_model_forward.1} parent=0 // pred_check_branch
    %10 = sbr.rel (0) target = $region9
  $region8: #{torch_custom_model_forward.1} parent=0 // pred_region
    _
  $region9: #{torch_custom_model_forward.1} parent=0 // pred_fallthru
    _
  %v11 = vld [vmem:[%s0] sm:$0xff]
  %v12 = vld [vmem:[%s1] sm:$0xff]
  %v13 = vld [vmem:[%s1 + $0x8] sm:$0xff]
  %v14 = vld [vmem:[%s1 + $0x10] sm:$0x1]
  %v15 = vlaneseq
  %v16 = vshrl.u32 %v15, 7
  %v17 = vsub.s32 0, %v16
  %v18 = vrot.slane %v14, %v17
  %vm19 = vcmask 130048
  %v21 = vsel %vm19, %v11, 0
  %23 = vmatprep.subr.mxu0 0.0
  %24 = vmatpush1.msra.mxu0 0.0
  %25 = vmatprep.subr.mxu0 0.0
  %26 = vmatpush1.msra.mxu0 0.0
  %27 = vmatprep.subr.mxu0 0.0
  %28 = vmatpush1.msra.mxu0 0.0
  %29 = vmatprep.subr.mxu0 0.0
  %30 = vmatpush1.msra.mxu0 0.0
  %31 = vmatprep.subr.mxu0 0.0
  %32 = vmatpush1.msra.mxu0 0.0
  %33 = vmatprep.subr.mxu0 0.0
  %34 = vmatpush1.msra.mxu0 0.0
  %35 = vmatprep.subr.mxu0 0.0
  %36 = vmatpush1.msra.mxu0 0.0
  %37 = vmatprep.subr.mxu0 0.0
  %38 = vmatpush1.msra.mxu0 0.0
  %39 = vmatprep.subr.mxu0 0.0
  %40 = vmatpush1.msra.mxu0 0.0
  %41 = vmatprep.subr.mxu0 0.0
  %42 = vmatpush1.msra.mxu0 0.0
  %43 = vmatprep.subr.mxu0 0.0
  %44 = vmatpush1.msra.mxu0 0.0
  %45 = vmatprep.subr.mxu0 0.0
  %46 = vmatpush1.msra.mxu0 0.0
  %47 = vmatprep.subr.mxu0 0.0
  %48 = vmatpush1.msra.mxu0 0.0
  %49 = vmatprep.subr.mxu0 0.0
  %50 = vmatpush1.msra.mxu0 0.0
  %51 = vmatprep.subr.mxu0 0.0
  %52 = vmatpush1.msra.mxu0 %v13
  %53 = vmatprep.subr.mxu0 0.0
  %54 = vmatpush1.msra.mxu0 %v12
  %55 = vmatprep.subr.mxu0 0.0
  %56 = vmatpush2.msra.mxu0 0.0
  %57 = vmatprep.subr.mxu0 0.0
  %58 = vmatpush2.msra.mxu0 0.0
  %59 = vmatprep.subr.mxu0 0.0
  %60 = vmatpush2.msra.mxu0 0.0
  %61 = vmatprep.subr.mxu0 0.0
  %62 = vmatpush2.msra.mxu0 0.0
  %63 = vmatprep.subr.mxu0 0.0
  %64 = vmatpush2.msra.mxu0 0.0
  %65 = vmatprep.subr.mxu0 0.0
  %66 = vmatpush2.msra.mxu0 0.0
  %67 = vmatprep.subr.mxu0 0.0
  %68 = vmatpush2.msra.mxu0 0.0
  %69 = vmatprep.subr.mxu0 0.0
  %70 = vmatpush2.msra.mxu0 0.0
  %71 = vmatprep.subr.mxu0 0.0
  %72 = vmatpush2.msra.mxu0 0.0
  %73 = vmatprep.subr.mxu0 0.0
  %74 = vmatpush2.msra.mxu0 0.0
  %75 = vmatprep.subr.mxu0 0.0
  %76 = vmatpush2.msra.mxu0 0.0
  %77 = vmatprep.subr.mxu0 0.0
  %78 = vmatpush2.msra.mxu0 0.0
  %79 = vmatprep.subr.mxu0 0.0
  %80 = vmatpush2.msra.mxu0 0.0
  %81 = vmatprep.subr.mxu0 0.0
  %82 = vmatpush2.msra.mxu0 0.0
  %83 = vmatprep.subr.mxu0 0.0
  %84 = vmatpush2.msra.mxu0 0.0
  %85 = vmatprep.subr.mxu0 0.0
  %86 = vmatpush2.msra.mxu0 0.0
  %87 = vmatprep.mubr.f32.mxu0 0.0
  %88 = vmatmul.mubr.f32.gmra.mxu0 %v21
  %v89 = vpop.f32.mrf.mxu0
  %v90 = vadd.f32 %v18, %v89
  %v91 = vpop.f32.mrf.mxu0
  %92 = vdwg.mxu0
  %v93 = vtanh.pop %v90
  %v94 = vld [vmem:[%s1 + $0x18] sm:$0xff]
  %v95 = vld [vmem:[%s1 + $0x20] sm:$0xff]
  %v96 = vld [vmem:[%s1 + $0x28] sm:$0xff]
  %v97 = vld [vmem:[%s1 + $0x30] sm:$0xff]
  %v98 = vld [vmem:[%s1 + $0x38] sm:$0xff]
  %v99 = vld [vmem:[%s1 + $0x40] sm:$0xff]
  %v100 = vld [vmem:[%s1 + $0x48] sm:$0xff]
  %v101 = vld [vmem:[%s1 + $0x50] sm:$0xff]
  %v102 = vld [vmem:[%s1 + $0x58] sm:$0xff]
  %v103 = vld [vmem:[%s1 + $0x60] sm:$0xff]
  %v104 = vld [vmem:[%s1 + $0x68] sm:$0xff]
  %v105 = vld [vmem:[%s1 + $0x70] sm:$0xff]
  %v106 = vld [vmem:[%s1 + $0x78] sm:$0xff]
  %v107 = vld [vmem:[%s1 + $0x80] sm:$0xff]
  %v108 = vld [vmem:[%s1 + $0x88] sm:$0xff]
  %v109 = vld [vmem:[%s1 + $0x90] sm:$0xff]
  %v110 = vld [vmem:[%s1 + $0x98] sm:$0x1]
  %v111 = vlaneseq
  %v112 = vshrl.u32 %v111, 7
  %v113 = vsub.s32 0, %v112
  %v114 = vrot.slane %v110, %v113
  %115 = vmatprep.subr.mxu0 0.0
  %116 = vmatpush1.msra.mxu0 %v109
  %117 = vmatprep.subr.mxu0 0.0
  %118 = vmatpush1.msra.mxu0 %v108
  %119 = vmatprep.subr.mxu0 0.0
  %120 = vmatpush1.msra.mxu0 %v107
  %121 = vmatprep.subr.mxu0 0.0
  %122 = vmatpush1.msra.mxu0 %v106
  %123 = vmatprep.subr.mxu0 0.0
  %124 = vmatpush1.msra.mxu0 %v105
  %125 = vmatprep.subr.mxu0 0.0
  %126 = vmatpush1.msra.mxu0 %v104
  %127 = vmatprep.subr.mxu0 0.0
  %128 = vmatpush1.msra.mxu0 %v103
  %129 = vmatprep.subr.mxu0 0.0
  %130 = vmatpush1.msra.mxu0 %v102
  %131 = vmatprep.subr.mxu0 0.0
  %132 = vmatpush1.msra.mxu0 %v101
  %133 = vmatprep.subr.mxu0 0.0
  %134 = vmatpush1.msra.mxu0 %v100
  %135 = vmatprep.subr.mxu0 0.0
  %136 = vmatpush1.msra.mxu0 %v99
  %137 = vmatprep.subr.mxu0 0.0
  %138 = vmatpush1.msra.mxu0 %v98
  %139 = vmatprep.subr.mxu0 0.0
  %140 = vmatpush1.msra.mxu0 %v97
  %141 = vmatprep.subr.mxu0 0.0
  %142 = vmatpush1.msra.mxu0 %v96
  %143 = vmatprep.subr.mxu0 0.0
  %144 = vmatpush1.msra.mxu0 %v95
  %145 = vmatprep.subr.mxu0 0.0
  %146 = vmatpush1.msra.mxu0 %v94
  %147 = vmatprep.subr.mxu0 0.0
  %148 = vmatpush2.msra.mxu0 0.0
  %149 = vmatprep.subr.mxu0 0.0
  %150 = vmatpush2.msra.mxu0 0.0
  %151 = vmatprep.subr.mxu0 0.0
  %152 = vmatpush2.msra.mxu0 0.0
  %153 = vmatprep.subr.mxu0 0.0
  %154 = vmatpush2.msra.mxu0 0.0
  %155 = vmatprep.subr.mxu0 0.0
  %156 = vmatpush2.msra.mxu0 0.0
  %157 = vmatprep.subr.mxu0 0.0
  %158 = vmatpush2.msra.mxu0 0.0
  %159 = vmatprep.subr.mxu0 0.0
  %160 = vmatpush2.msra.mxu0 0.0
  %161 = vmatprep.subr.mxu0 0.0
  %162 = vmatpush2.msra.mxu0 0.0
  %163 = vmatprep.subr.mxu0 0.0
  %164 = vmatpush2.msra.mxu0 0.0
  %165 = vmatprep.subr.mxu0 0.0
  %166 = vmatpush2.msra.mxu0 0.0
  %167 = vmatprep.subr.mxu0 0.0
  %168 = vmatpush2.msra.mxu0 0.0
  %169 = vmatprep.subr.mxu0 0.0
  %170 = vmatpush2.msra.mxu0 0.0
  %171 = vmatprep.subr.mxu0 0.0
  %172 = vmatpush2.msra.mxu0 0.0
  %173 = vmatprep.subr.mxu0 0.0
  %174 = vmatpush2.msra.mxu0 0.0
  %175 = vmatprep.subr.mxu0 0.0
  %176 = vmatpush2.msra.mxu0 0.0
  %177 = vmatprep.subr.mxu0 0.0
  %178 = vmatpush2.msra.mxu0 0.0
  %179 = vmatprep.mubr.f32.mxu0 0.0
  %180 = vmatmul.mubr.f32.gmra.mxu0 %v93
  %v181 = vpop.f32.mrf.mxu0
  %v182 = vadd.f32 %v114, %v181
  %v183 = vpop.f32.mrf.mxu0
  %184 = vdwg.mxu0
  %v185 = vtanh.pop %v182
  %v186 = vld [vmem:[%s1 + $0xa0] sm:$0xff]
  %v187 = vld [vmem:[%s1 + $0xa8] sm:$0xff]
  %v188 = vld [vmem:[%s1 + $0xb0] sm:$0xff]
  %v189 = vld [vmem:[%s1 + $0xb8] sm:$0xff]
  %v190 = vld [vmem:[%s1 + $0xc0] sm:$0xff]
  %v191 = vld [vmem:[%s1 + $0xc8] sm:$0xff]
  %v192 = vld [vmem:[%s1 + $0xd0] sm:$0xff]
  %v193 = vld [vmem:[%s1 + $0xd8] sm:$0xff]
  %v194 = vld [vmem:[%s1 + $0xe0] sm:$0xff]
  %v195 = vld [vmem:[%s1 + $0xe8] sm:$0xff]
  %v196 = vld [vmem:[%s1 + $0xf0] sm:$0xff]
  %v197 = vld [vmem:[%s1 + $0xf8] sm:$0xff]
  %v198 = vld [vmem:[%s1 + $0x100] sm:$0xff]
  %v199 = vld [vmem:[%s1 + $0x108] sm:$0xff]
  %v200 = vld [vmem:[%s1 + $0x110] sm:$0xff]
  %v201 = vld [vmem:[%s1 + $0x118] sm:$0xff]
  %v202 = vld [vmem:[%s1 + $0x120] sm:$0x1]
  %v203 = vlaneseq
  %v204 = vshrl.u32 %v203, 7
  %v205 = vsub.s32 0, %v204
  %v206 = vrot.slane %v202, %v205
  %207 = vmatprep.subr.mxu0 0.0
  %208 = vmatpush1.msra.mxu0 %v201
  %209 = vmatprep.subr.mxu0 0.0
  %210 = vmatpush1.msra.mxu0 %v200
  %211 = vmatprep.subr.mxu0 0.0
  %212 = vmatpush1.msra.mxu0 %v199
  %213 = vmatprep.subr.mxu0 0.0
  %214 = vmatpush1.msra.mxu0 %v198
  %215 = vmatprep.subr.mxu0 0.0
  %216 = vmatpush1.msra.mxu0 %v197
  %217 = vmatprep.subr.mxu0 0.0
  %218 = vmatpush1.msra.mxu0 %v196
  %219 = vmatprep.subr.mxu0 0.0
  %220 = vmatpush1.msra.mxu0 %v195
  %221 = vmatprep.subr.mxu0 0.0
  %222 = vmatpush1.msra.mxu0 %v194
  %223 = vmatprep.subr.mxu0 0.0
  %224 = vmatpush1.msra.mxu0 %v193
  %225 = vmatprep.subr.mxu0 0.0
  %226 = vmatpush1.msra.mxu0 %v192
  %227 = vmatprep.subr.mxu0 0.0
  %228 = vmatpush1.msra.mxu0 %v191
  %229 = vmatprep.subr.mxu0 0.0
  %230 = vmatpush1.msra.mxu0 %v190
  %231 = vmatprep.subr.mxu0 0.0
  %232 = vmatpush1.msra.mxu0 %v189
  %233 = vmatprep.subr.mxu0 0.0
  %234 = vmatpush1.msra.mxu0 %v188
  %235 = vmatprep.subr.mxu0 0.0
  %236 = vmatpush1.msra.mxu0 %v187
  %237 = vmatprep.subr.mxu0 0.0
  %238 = vmatpush1.msra.mxu0 %v186
  %239 = vmatprep.subr.mxu0 0.0
  %240 = vmatpush2.msra.mxu0 0.0
  %241 = vmatprep.subr.mxu0 0.0
  %242 = vmatpush2.msra.mxu0 0.0
  %243 = vmatprep.subr.mxu0 0.0
  %244 = vmatpush2.msra.mxu0 0.0
  %245 = vmatprep.subr.mxu0 0.0
  %246 = vmatpush2.msra.mxu0 0.0
  %247 = vmatprep.subr.mxu0 0.0
  %248 = vmatpush2.msra.mxu0 0.0
  %249 = vmatprep.subr.mxu0 0.0
  %250 = vmatpush2.msra.mxu0 0.0
  %251 = vmatprep.subr.mxu0 0.0
  %252 = vmatpush2.msra.mxu0 0.0
  %253 = vmatprep.subr.mxu0 0.0
  %254 = vmatpush2.msra.mxu0 0.0
  %255 = vmatprep.subr.mxu0 0.0
  %256 = vmatpush2.msra.mxu0 0.0
  %257 = vmatprep.subr.mxu0 0.0
  %258 = vmatpush2.msra.mxu0 0.0
  %259 = vmatprep.subr.mxu0 0.0
  %260 = vmatpush2.msra.mxu0 0.0
  %261 = vmatprep.subr.mxu0 0.0
  %262 = vmatpush2.msra.mxu0 0.0
  %263 = vmatprep.subr.mxu0 0.0
  %264 = vmatpush2.msra.mxu0 0.0
  %265 = vmatprep.subr.mxu0 0.0
  %266 = vmatpush2.msra.mxu0 0.0
  %267 = vmatprep.subr.mxu0 0.0
  %268 = vmatpush2.msra.mxu0 0.0
  %269 = vmatprep.subr.mxu0 0.0
  %270 = vmatpush2.msra.mxu0 0.0
  %271 = vmatprep.mubr.f32.mxu0 0.0
  %272 = vmatmul.mubr.f32.gmra.mxu0 %v185
  %v273 = vpop.f32.mrf.mxu0
  %v274 = vadd.f32 %v206, %v273
  %v275 = vpop.f32.mrf.mxu0
  %276 = vdwg.mxu0
  %277 = vst [vmem:[%s2] sm:$0xff] %v274
  // Predicated region
  $region10: #{torch_custom_model_forward.1} parent=0 // pred_check
    _
  $region11: #{torch_custom_model_forward.1} parent=0 // pred_check_branch
    %279 = sbr.rel (0) target = $region13
  $region12: #{torch_custom_model_forward.1} parent=0 // pred_region
    _
  $region13: #{torch_custom_model_forward.1} parent=0 // pred_fallthru
    _
  // Predicated region
  $region14: #{torch_custom_model_forward.1} parent=0 // pred_check
    _
  $region15: #{torch_custom_model_forward.1} parent=0 // pred_check_branch
    %281 = sbr.rel (0) target = $region17
  $region16: #{torch_custom_model_forward.1} parent=0 // pred_region
    _
  $region17: #{torch_custom_model_forward.1} parent=0 // pred_fallthru
    _

</llo_original>
